<compile_context>
chip_gen: v7x
topology: tpu7x:2x2x1
jax: 0.10.0
libtpu: 0.0.40
codegen_flags: <defaults>
</compile_context>

<pallas_src>
import math

import jax
import jax.numpy as jnp
from jax.experimental import pallas as pl
from jax.experimental.pallas import tpu as pltpu


def identity_copy_kernel(x_ref, o_ref):
    # Pure DMA-bound tile copy; no per-element work (keeps v5e store-slot free).
    o_ref[...] = x_ref[...]


def _lane_dense_2d(total_elems):
    """Pick a (rows, cols) factorization with cols a large multiple of 128."""
    for cols in (2048, 1024, 512, 256, 128):
        if total_elems % cols == 0:
            return total_elems // cols, cols
    return None


def _choose_block_rows(rows, cols, itemsize, max_tile_bytes=2 * 1024 * 1024):
    """Largest multiple-of-8 row tile with tile_bytes <= max_tile_bytes."""
    if rows <= 8:
        return rows  # block dim equals full array dim -> layout constraint OK
    max_rows = max(8, max_tile_bytes // (cols * itemsize))
    br = min(rows, max_rows)
    br = max(8, (br // 8) * 8)
    return br


def _identity_pallas(x):
    orig_shape = x.shape
    orig_dtype = x.dtype
    total = math.prod(orig_shape) if x.ndim >= 1 else 1
    if total == 0:
        return x

    fact = _lane_dense_2d(total)
    if fact is not None:
        rows, cols = fact
        block_rows = _choose_block_rows(rows, cols, x.dtype.itemsize)
    else:
        # Fallback for totals not divisible by 128: single full-array block
        # (block dims equal full array dims, so no (8,128) constraint issue).
        cols = orig_shape[-1] if x.ndim >= 1 else 1
        rows = total // cols
        block_rows = rows

    x2d = x.reshape(rows, cols)
    grid = (pl.cdiv(rows, block_rows),)

    out2d = pl.pallas_call(
        identity_copy_kernel,
        out_shape=jax.ShapeDtypeStruct((rows, cols), orig_dtype),
        grid=grid,
        in_specs=[pl.BlockSpec((block_rows, cols), lambda i: (i, 0))],
        out_specs=pl.BlockSpec((block_rows, cols), lambda i: (i, 0)),
        # Output aliases the input buffer: identity needs no new HBM output.
        input_output_aliases={0: 0},
        compiler_params=pltpu.CompilerParams(
            dimension_semantics=("parallel",),
        ),
    )(x2d)

    return out2d.reshape(orig_shape)


# Donate the input so the aliased output can truly reuse its HBM buffer.
_identity_jit = jax.jit(_identity_pallas, donate_argnums=(0,))


def your_model_forward(x):
    """YourModel.forward(x) == x, executed through a Pallas TPU kernel."""
    return _identity_jit(x)


if __name__ == "__main__":
    key = jax.random.PRNGKey(0)
    shape = (2, 4, 16, 16)

    # x is donated to the kernel; regenerate the same values for verification.
    x = jax.random.normal(key, shape, dtype=jnp.float32)
    expected = jax.random.normal(key, shape, dtype=jnp.float32)

    y = your_model_forward(x)
    jax.block_until_ready(y)

    assert y.shape == expected.shape
    assert y.dtype == expected.dtype
    assert bool(jnp.allclose(y, expected)), "identity kernel mismatch"

    print("KERNEL_OK")
</pallas_src>

<mosaic_0001>
module attributes {stable_mosaic.version = 11 : i64} {
  func.func @identity_copy_kernel(%arg0: i32, %arg1: memref<1x2048xf32, #tpu.memory_space<vmem>>, %arg2: memref<1x2048xf32, #tpu.memory_space<vmem>>) attributes {dimension_semantics = [#tpu.dimension_semantics<parallel>], iteration_bounds = array<i64: 1>, scalar_prefetch = 0 : i64, scratch_operands = 0 : i64, tpu.core_type = #tpu.core_type<tc>, window_params = [{transform_indices = @transform_0, window_bounds = array<i64: 1, 2048>}, {transform_indices = @transform_1, window_bounds = array<i64: 1, 2048>}]} {
    %c0 = arith.constant 0 : index
    %c0_0 = arith.constant 0 : index
    %0 = vector.load %arg1[%c0, %c0_0] : memref<1x2048xf32, #tpu.memory_space<vmem>>, vector<1x2048xf32>
    %c0_1 = arith.constant 0 : index
    %c0_2 = arith.constant 0 : index
    %1 = vector.load %arg2[%c0_1, %c0_2] : memref<1x2048xf32, #tpu.memory_space<vmem>>, vector<1x2048xf32>
    tpu.vector_store %arg2[%c0_1, %c0_2], %0 {strides = array<i32>} : memref<1x2048xf32, #tpu.memory_space<vmem>>, vector<1x2048xf32>,
    return
  }
  func.func @transform_0(%arg0: i32) -> (i32, i32) {
    %c0_i32 = arith.constant 0 : i32
    %c0_i32_0 = arith.constant 0 : i32
    return %arg0, %c0_i32 : i32, i32
  }
  func.func @transform_1(%arg0: i32) -> (i32, i32) {
    %c0_i32 = arith.constant 0 : i32
    %c0_i32_0 = arith.constant 0 : i32
    return %arg0, %c0_i32 : i32, i32
  }
}

</mosaic_0001>

<llo_original>
// kernel: _identity_pallas.1
$region0: #{_identity_pallas.1}
  #allocation0 [shape = 'u32[]', space=smem, size = 0x4, offset = 0x4, fixed_abs, tag = 'smem constant byte address 0x4 - core index']
  #allocation1 [shape = 'u32[144,128]{1,0:T(1,128)}', space=vmem, size = 0x12000, scoped, tag = 'internal scratch']
  %s0 = inlined_call_operand.vmem [shape: f32[1,2048], index: 0, kind: input, shape index: {}, may-alias: {0,1}]
  %s1 = inlined_call_operand.vmem [shape: f32[1,2048], index: 1, kind: output, shape index: {}, may-alias: {0,1}]
  %s2 = sld [smem:[#allocation0]]
  $region14: #{_identity_pallas.1} parent=0
    _
  %s4 = ssub.s32 1, %s2
  %s5 = scalar_select 0, %s4, %s2
  // Predicated region
  $region2: #{_identity_pallas.1} parent=0 // pred_check
    _
  $region3: #{_identity_pallas.1} parent=0 // pred_check_branch
    %7 = sbr.rel (0) target = $region5
  $region4: #{_identity_pallas.1} parent=0 // pred_region
    _
  $region5: #{_identity_pallas.1} parent=0 // pred_fallthru
    _
  %v8 = vld [vmem:[%s0] sm:$0xff]
  %v9 = vld [vmem:[%s0 + $0x8] sm:$0xff]
  %10 = vst [vmem:[%s1] sm:$0xff] %v8
  %11 = vst [vmem:[%s1 + $0x8] sm:$0xff] %v9
  // Predicated region
  $region6: #{_identity_pallas.1} parent=0 // pred_check
    _
  $region7: #{_identity_pallas.1} parent=0 // pred_check_branch
    %13 = sbr.rel (0) target = $region9
  $region8: #{_identity_pallas.1} parent=0 // pred_region
    _
  $region9: #{_identity_pallas.1} parent=0 // pred_fallthru
    _
  // Predicated region
  $region10: #{_identity_pallas.1} parent=0 // pred_check
    _
  $region11: #{_identity_pallas.1} parent=0 // pred_check_branch
    %15 = sbr.rel (0) target = $region13
  $region12: #{_identity_pallas.1} parent=0 // pred_region
    _
  $region13: #{_identity_pallas.1} parent=0 // pred_fallthru
    _

</llo_original>
